<compile_context>
chip_gen: v7x
topology: tpu7x:2x2x1
jax: 0.10.0
libtpu: 0.0.40
codegen_flags: <defaults>
</compile_context>

<pallas_src>
import jax
import jax.numpy as jnp
import numpy as np
from jax.experimental import pallas as pl
from jax.experimental.pallas import tpu as pltpu


def _round_up(n: int, m: int) -> int:
    return ((n + m - 1) // m) * m


def _detect_post_kernel(boxes_ref, out_ref):
    """boxes_ref: (6, tile_r, 128) f32 block; out_ref: (2, tile_r, 128) f32 block."""
    x_min = boxes_ref[0]                     # (tile_r, 128) dense vreg-aligned slabs
    y_min = boxes_ref[1]
    x_max = boxes_ref[2]
    y_max = boxes_ref[3]
    score = boxes_ref[4]

    area = (x_max - x_min) * (y_max - y_min)
    pct = score * 100.0

    # round(x, 2) == round(x * 100) / 100  (IEEE round-half-to-even, like numpy)
    out_ref[0] = jnp.round(area * 100.0) / 100.0
    out_ref[1] = jnp.round(pct * 100.0) / 100.0


def detect_post_process_packed(slab: jax.Array) -> jax.Array:
    """Pallas post-processing on a packed (6, R, 128) f32 box slab.

    Rows of the leading axis are [x_min, y_min, x_max, y_max, score, cls];
    boxes live along the trailing (R, 128) lane grid.  Returns a (2, R, 128)
    f32 slab: row0 = round(area, 2), row1 = round(score * 100, 2).
    """
    assert slab.ndim == 3 and slab.shape[0] == 6 and slab.shape[2] == 128
    r = slab.shape[1]

    # Tile selection: big tiles to amortize per-step overhead; >= 2 grid steps
    # when there is enough data so v7x can use both TensorCores.
    if r < 16:
        tile_r = r                                   # single full-extent block
    elif r <= 512:
        tile_r = _round_up(pl.cdiv(r, 2), 8)         # 2 parallel steps
    else:
        tile_r = 256                                 # 32768 boxes per step

    r_pad = _round_up(r, tile_r)
    if r_pad != r:
        slab = jnp.pad(slab, ((0, 0), (0, r_pad - r), (0, 0)))

    grid = (r_pad // tile_r,)
    out = pl.pallas_call(
        _detect_post_kernel,
        out_shape=jax.ShapeDtypeStruct((2, r_pad, 128), jnp.float32),
        grid=grid,
        in_specs=[pl.BlockSpec((6, tile_r, 128), lambda i: (0, i, 0))],
        out_specs=pl.BlockSpec((2, tile_r, 128), lambda i: (0, i, 0)),
        compiler_params=pltpu.CompilerParams(
            dimension_semantics=("parallel",),
        ),
    )(slab)
    return out[:, :r, :]


def detect_post_process(boxes: jax.Array) -> jax.Array:
    """Convenience wrapper: Pallas equivalent of DetectNet.result().

    Args:
      boxes: (N, 6) float32 array of [x_min, y_min, x_max, y_max, score, cls].
    Returns:
      (N, 2) float32 array of [round(area, 2), round(score * 100, 2)].

    The (N, 6) <-> packed-slab relayouts below are extra XLA passes; callers
    on a hot path should produce / consume the packed layout directly via
    detect_post_process_packed().
    """
    boxes = jnp.asarray(boxes, jnp.float32)
    n = boxes.shape[0]
    n_pad = max(_round_up(max(n, 1), 128), 128)
    r = n_pad // 128

    # Pack: (N, 6) -> (6, R, 128), fields on the leading axis, boxes on lanes.
    padded = jnp.pad(boxes, ((0, n_pad - n), (0, 0)))          # (n_pad, 6)
    slab = padded.T.reshape(6, r, 128)

    out = detect_post_process_packed(slab)                     # (2, R, 128)

    # Unpack: drop lane padding (padded lanes would look like zero-area boxes).
    return out.reshape(2, r * 128)[:, :n].T                    # (N, 2)


if __name__ == "__main__":
    # Deterministic small example: 37 synthetic detections.
    key = jax.random.PRNGKey(0)
    k_xy, k_wh, k_sc, k_cls = jax.random.split(key, 4)
    n_boxes = 37
    xy_min = jax.random.uniform(k_xy, (n_boxes, 2), jnp.float32, 0.0, 400.0)
    wh = jax.random.uniform(k_wh, (n_boxes, 2), jnp.float32, 1.0, 200.0)
    score = jax.random.uniform(k_sc, (n_boxes, 1), jnp.float32, 0.0, 1.0)
    cls = jax.random.randint(k_cls, (n_boxes, 1), 0, 80).astype(jnp.float32)
    boxes = jnp.concatenate([xy_min, xy_min + wh, score, cls], axis=1)  # (N, 6)

    result = jax.block_until_ready(detect_post_process(boxes))

    # Pure-numpy reference of DetectNet.result().
    b_np = np.asarray(boxes, dtype=np.float64)
    ref_area = np.round((b_np[:, 2] - b_np[:, 0]) * (b_np[:, 3] - b_np[:, 1]), 2)
    ref_score = np.round(b_np[:, 4] * 100.0, 2)
    ref = np.stack([ref_area, ref_score], axis=1)

    np.testing.assert_allclose(np.asarray(result), ref, rtol=1e-5, atol=0.02)
    print("KERNEL_OK")
</pallas_src>

<mosaic_0001>
module attributes {stable_mosaic.version = 11 : i64} {
  func.func @_detect_post_kernel(%arg0: i32, %arg1: memref<6x1x128xf32, #tpu.memory_space<vmem>>, %arg2: memref<2x1x128xf32, #tpu.memory_space<vmem>>) attributes {dimension_semantics = [#tpu.dimension_semantics<parallel>], iteration_bounds = array<i64: 1>, scalar_prefetch = 0 : i64, scratch_operands = 0 : i64, tpu.core_type = #tpu.core_type<tc>, window_params = [{transform_indices = @transform_0, window_bounds = array<i64: 6, 1, 128>}, {transform_indices = @transform_1, window_bounds = array<i64: 2, 1, 128>}]} {
    %c0 = arith.constant 0 : index
    %c0_0 = arith.constant 0 : index
    %c0_1 = arith.constant 0 : index
    %0 = vector.load %arg1[%c0, %c0_0, %c0_1] : memref<6x1x128xf32, #tpu.memory_space<vmem>>, vector<1x1x128xf32>
    %1 = vector.shape_cast %0 : vector<1x1x128xf32> to vector<1x128xf32>
    %c1 = arith.constant 1 : index
    %c0_2 = arith.constant 0 : index
    %c0_3 = arith.constant 0 : index
    %2 = vector.load %arg1[%c1, %c0_2, %c0_3] : memref<6x1x128xf32, #tpu.memory_space<vmem>>, vector<1x1x128xf32>
    %3 = vector.shape_cast %2 : vector<1x1x128xf32> to vector<1x128xf32>
    %c2 = arith.constant 2 : index
    %c0_4 = arith.constant 0 : index
    %c0_5 = arith.constant 0 : index
    %4 = vector.load %arg1[%c2, %c0_4, %c0_5] : memref<6x1x128xf32, #tpu.memory_space<vmem>>, vector<1x1x128xf32>
    %5 = vector.shape_cast %4 : vector<1x1x128xf32> to vector<1x128xf32>
    %c3 = arith.constant 3 : index
    %c0_6 = arith.constant 0 : index
    %c0_7 = arith.constant 0 : index
    %6 = vector.load %arg1[%c3, %c0_6, %c0_7] : memref<6x1x128xf32, #tpu.memory_space<vmem>>, vector<1x1x128xf32>
    %7 = vector.shape_cast %6 : vector<1x1x128xf32> to vector<1x128xf32>
    %c4 = arith.constant 4 : index
    %c0_8 = arith.constant 0 : index
    %c0_9 = arith.constant 0 : index
    %8 = vector.load %arg1[%c4, %c0_8, %c0_9] : memref<6x1x128xf32, #tpu.memory_space<vmem>>, vector<1x1x128xf32>
    %9 = vector.shape_cast %8 : vector<1x1x128xf32> to vector<1x128xf32>
    %10 = arith.subf %5, %1 : vector<1x128xf32>
    %11 = arith.subf %7, %3 : vector<1x128xf32>
    %12 = arith.mulf %10, %11 : vector<1x128xf32>
    %cst = arith.constant 1.000000e+02 : f32
    %13 = vector.broadcast %cst : f32 to vector<1x128xf32>
    %14 = arith.mulf %9, %13 : vector<1x128xf32>
    %cst_10 = arith.constant 1.000000e+02 : f32
    %15 = vector.broadcast %cst_10 : f32 to vector<1x128xf32>
    %16 = arith.mulf %12, %15 : vector<1x128xf32>
    %17 = math.roundeven %16 : vector<1x128xf32>
    %cst_11 = arith.constant 1.000000e+02 : f32
    %18 = vector.broadcast %cst_11 : f32 to vector<1x128xf32>
    %19 = arith.divf %17, %18 : vector<1x128xf32>
    %c0_12 = arith.constant 0 : index
    %c0_13 = arith.constant 0 : index
    %c0_14 = arith.constant 0 : index
    %20 = vector.load %arg2[%c0_12, %c0_13, %c0_14] : memref<2x1x128xf32, #tpu.memory_space<vmem>>, vector<1x1x128xf32>
    %21 = vector.shape_cast %20 : vector<1x1x128xf32> to vector<1x128xf32>
    %22 = vector.shape_cast %19 : vector<1x128xf32> to vector<1x1x128xf32>
    tpu.vector_store %arg2[%c0_12, %c0_13, %c0_14], %22 {strides = array<i32>} : memref<2x1x128xf32, #tpu.memory_space<vmem>>, vector<1x1x128xf32>,
    %cst_15 = arith.constant 1.000000e+02 : f32
    %23 = vector.broadcast %cst_15 : f32 to vector<1x128xf32>
    %24 = arith.mulf %14, %23 : vector<1x128xf32>
    %25 = math.roundeven %24 : vector<1x128xf32>
    %cst_16 = arith.constant 1.000000e+02 : f32
    %26 = vector.broadcast %cst_16 : f32 to vector<1x128xf32>
    %27 = arith.divf %25, %26 : vector<1x128xf32>
    %c1_17 = arith.constant 1 : index
    %c0_18 = arith.constant 0 : index
    %c0_19 = arith.constant 0 : index
    %28 = vector.load %arg2[%c1_17, %c0_18, %c0_19] : memref<2x1x128xf32, #tpu.memory_space<vmem>>, vector<1x1x128xf32>
    %29 = vector.shape_cast %28 : vector<1x1x128xf32> to vector<1x128xf32>
    %30 = vector.shape_cast %27 : vector<1x128xf32> to vector<1x1x128xf32>
    tpu.vector_store %arg2[%c1_17, %c0_18, %c0_19], %30 {strides = array<i32>} : memref<2x1x128xf32, #tpu.memory_space<vmem>>, vector<1x1x128xf32>,
    return
  }
  func.func @transform_0(%arg0: i32) -> (i32, i32, i32) {
    %c0_i32 = arith.constant 0 : i32
    %c0_i32_0 = arith.constant 0 : i32
    %c0_i32_1 = arith.constant 0 : i32
    return %c0_i32, %arg0, %c0_i32_0 : i32, i32, i32
  }
  func.func @transform_1(%arg0: i32) -> (i32, i32, i32) {
    %c0_i32 = arith.constant 0 : i32
    %c0_i32_0 = arith.constant 0 : i32
    %c0_i32_1 = arith.constant 0 : i32
    return %c0_i32, %arg0, %c0_i32_0 : i32, i32, i32
  }
}

</mosaic_0001>

<llo_original>
// kernel: tpu_custom_call.1
$region0: #{tpu_custom_call.1}
  #allocation0 [shape = 'u32[]', space=smem, size = 0x4, offset = 0x4, fixed_abs, tag = 'smem constant byte address 0x4 - core index']
  #allocation1 [shape = 'u32[144,128]{1,0:T(1,128)}', space=vmem, size = 0x12000, scoped, tag = 'internal scratch']
  %s0 = inlined_call_operand.hbm [shape: f32[6,1,128], index: 0, kind: input, shape index: {}]
  %s1 = inlined_call_operand.hbm [shape: f32[2,1,128], index: 1, kind: output, shape index: {}]
  %s2 = sld [smem:[#allocation0]]
  $region18: #{tpu_custom_call.1} parent=0
    _
  %s4 = ssub.s32 1, %s2
  %s5 = scalar_select 0, %s4, %s2
  $region1: #{tpu_custom_call.1} parent=0
    #allocation2 [shape = 'u8[3072]{0}', space=vmem, size = 0xc00, scoped, tag = 'input window, operand 0, single buffered']
    #allocation3 [shape = 's32[1]{0}', space=sflag, size = 0x4, scoped, tag = 'scoped memory for tpu_custom_call.1']
    #allocation4 [shape = 's32[1]{0}', space=sflag, size = 0x4, scoped, tag = 'scoped memory for tpu_custom_call.1']
    #allocation5 [shape = 'u8[1024]{0}', space=vmem, size = 0x400, scoped, tag = 'output window, operand 0, single buffered']
    %6 = vsyncpa [#allocation3], 0
    %7 = vsyncpa [#allocation4], 0
    // Predicated region
    $region2: #{tpu_custom_call.1} parent=1 // pred_check
      _
    $region3: #{tpu_custom_call.1} parent=1 // pred_check_branch
      %9 = sbr.rel (0) target = $region5
    $region4: #{tpu_custom_call.1} parent=1 // pred_region
      %s11 = ssub.s32 96, 96
      %12 = vsyncadd [#allocation3], %s11
      %s13 = sshll.u32 [#allocation2], 4
      %s14 = int_to_ptr.vmem [resolvable:$true] %s13
      %19 = dma.hbm_to_vmem [thread:$0]  %s0, 96, %s14, [#allocation3], 16, 16, 1
    $region5: #{tpu_custom_call.1} parent=1 // pred_fallthru
      _
    // Predicated region
    $region6: #{tpu_custom_call.1} parent=1 // pred_check
      _
    $region7: #{tpu_custom_call.1} parent=1 // pred_check_branch
      %21 = sbr.rel (0) target = $region9
    $region8: #{tpu_custom_call.1} parent=1 // pred_region
      %22 = dma.done [#allocation3], 96
    $region9: #{tpu_custom_call.1} parent=1 // pred_fallthru
      _
    %v23 = vld [vmem:[#allocation2] sm:$0x1]
    %s24 = scalar_lea.vmem [#allocation2], 1
    %v25 = vld [vmem:[%s24] sm:$0x1]
    %s26 = scalar_lea.vmem [#allocation2], 2
    %v27 = vld [vmem:[%s26] sm:$0x1]
    %s28 = scalar_lea.vmem [#allocation2], 3
    %v29 = vld [vmem:[%s28] sm:$0x1]
    %s30 = scalar_lea.vmem [#allocation2], 4
    %v31 = vld [vmem:[%s30] sm:$0x1]
    %v32 = vsub.f32 %v27, %v23
    %v33 = vsub.f32 %v29, %v25
    %v34 = vmul.f32 %v32, %v33
    %v35 = vmul.f32 %v31, 100.0
    %v36 = vmul.f32 %v34, 100.0
    %v37 = vround.ne.pseudo %v36
    %v38 = vrcp.pop 100.0
    %v39 = vmul.f32 %v37, %v38
    %40 = vst [vmem:[#allocation5] sm:$0x1] %v39
    %v41 = vmul.f32 %v35, 100.0
    %v42 = vround.ne.pseudo %v41
    %v43 = vmul.f32 %v42, %v38
    %s44 = scalar_lea.vmem [#allocation5], 1
    %45 = vst [vmem:[%s44] sm:$0x1] %v43
    // Predicated region
    $region10: #{tpu_custom_call.1} parent=1 // pred_check
      _
    $region11: #{tpu_custom_call.1} parent=1 // pred_check_branch
      %47 = sbr.rel (0) target = $region13
    $region12: #{tpu_custom_call.1} parent=1 // pred_region
      %s49 = ssub.s32 32, 32
      %50 = vsyncadd [#allocation4], %s49
      %s51 = sshll.u32 [#allocation5], 4
      %s52 = int_to_ptr.vmem [resolvable:$true] %s51
      %57 = dma.vmem_to_hbm [thread:$0]  %s52, 32, %s1, [#allocation4], 16, 16, 1
    $region13: #{tpu_custom_call.1} parent=1 // pred_fallthru
      _
    // Predicated region
    $region14: #{tpu_custom_call.1} parent=1 // pred_check
      _
    $region15: #{tpu_custom_call.1} parent=1 // pred_check_branch
      %59 = sbr.rel (0) target = $region17
    $region16: #{tpu_custom_call.1} parent=1 // pred_region
      %60 = dma.done [#allocation4], 32
    $region17: #{tpu_custom_call.1} parent=1 // pred_fallthru
      _
    %61 = vsyncpa [#allocation3], 1
    %62 = vsyncpa [#allocation4], 1

</llo_original>
